<compile_context>
chip_gen: v5e
topology: v5e:2x2
jax: 0.10.0
libtpu: 0.0.40
codegen_flags: <defaults>
</compile_context>

<pallas_src>
import functools

import jax
import jax.numpy as jnp
from jax.experimental import pallas as pl
from jax.experimental.pallas import tpu as pltpu


def derivtanh_kernel(x_ref, o_ref):
    # x_ref: (tm, tn) tile of x;  o_ref: (tn, tm) tile of the transposed output.
    t = jnp.tanh(x_ref[...])
    # DerivTanh: 4/(exp(-h)+exp(h))^2 == 1 - tanh(h)^2  (single EUP op).
    o_ref[...] = jnp.transpose(1.0 - t * t)


def _round_up(v, m):
    return ((v + m - 1) // m) * m


@functools.partial(jax.jit, static_argnames=("tm", "tn"))
def _derivtanh_impl(x, *, tm, tn):
    M, N = x.shape
    Mp = _round_up(M, tm)
    Np = _round_up(N, tn)
    if (Mp, Np) != (M, N):
        # Zero-padded tail; padded rows/cols are sliced off below.
        x = jnp.pad(x, ((0, Mp - M), (0, Np - N)))

    grid = (Mp // tm, Np // tn)

    out = pl.pallas_call(
        derivtanh_kernel,
        out_shape=jax.ShapeDtypeStruct((Np, Mp), x.dtype),
        grid_spec=pltpu.PrefetchScalarGridSpec(
            num_scalar_prefetch=0,
            grid=grid,
            in_specs=[pl.BlockSpec((tm, tn), lambda i, j: (i, j))],
            # Transposed placement: block (i, j) of x lands at block (j, i)
            # of the (N, M)-shaped output.
            out_specs=pl.BlockSpec((tn, tm), lambda i, j: (j, i)),
        ),
        compiler_params=pltpu.CompilerParams(
            dimension_semantics=("parallel", "parallel")),
    )(x)

    return out[:N, :M]


def _choose_tile(dim, cap=512):
    # Multiple of 128 so both the input tile and the transposed output tile are
    # lane-dense; capped so double-buffered input+output stay a few MiB.
    return min(cap, _round_up(max(dim, 1), 128))


def derivtanh(x, *, tm=None, tn=None):
    """Pallas TPU implementation of DerivTanh.forward (batch-major f32 input)."""
    assert x.ndim == 2, "DerivTanh (torch .t()) is defined for 2-D inputs"
    M, N = x.shape
    if tm is None:
        tm = _choose_tile(M)
    if tn is None:
        tn = _choose_tile(N)
    return _derivtanh_impl(x, tm=int(tm), tn=int(tn))


def derivtanh_ref(x):
    """Pure-JAX reference mirroring the PyTorch forward exactly."""
    xt = x.T
    return 4.0 / (jnp.exp(-xt) + jnp.exp(xt)) ** 2


if __name__ == "__main__":
    key = jax.random.PRNGKey(0)
    k1, k2 = jax.random.split(key)

    # Small, module-consistent 2-D input (DerivTanh transposes its input).
    x = jax.random.normal(k1, (64, 32), jnp.float32)
    y = derivtanh(x)
    jax.block_until_ready(y)
    y_ref = derivtanh_ref(x)
    assert y.shape == (32, 64)
    # 1 - tanh(h)^2 vs 4/(e^-h + e^h)^2 differ only by ulp-level cancellation.
    assert jnp.allclose(y, y_ref, atol=1e-6, rtol=1e-5)

    # Ragged shape with larger-magnitude values (exercises the zero-padded
    # tile path and saturated units).
    x2 = 3.0 * jax.random.normal(k2, (37, 100), jnp.float32)
    y2 = derivtanh(x2)
    jax.block_until_ready(y2)
    y2_ref = derivtanh_ref(x2)
    assert y2.shape == (100, 37)
    assert jnp.allclose(y2, y2_ref, atol=1e-6, rtol=1e-5)

    print("KERNEL_OK")
</pallas_src>

<mosaic_0001>
module attributes {stable_mosaic.version = 11 : i64} {
  func.func @derivtanh_kernel(%arg0: i32, %arg1: i32, %arg2: memref<128x128xf32, #tpu.memory_space<vmem>>, %arg3: memref<128x128xf32, #tpu.memory_space<vmem>>) attributes {dimension_semantics = [#tpu.dimension_semantics<parallel>, #tpu.dimension_semantics<parallel>], iteration_bounds = array<i64: 1, 1>, scalar_prefetch = 0 : i64, scratch_operands = 0 : i64, tpu.core_type = #tpu.core_type<tc>, window_params = [{transform_indices = @transform_0, window_bounds = array<i64: 128, 128>}, {transform_indices = @transform_1, window_bounds = array<i64: 128, 128>}]} {
    %c0 = arith.constant 0 : index
    %c0_0 = arith.constant 0 : index
    %0 = vector.load %arg2[%c0, %c0_0] : memref<128x128xf32, #tpu.memory_space<vmem>>, vector<128x128xf32>
    %1 = math.tanh %0 : vector<128x128xf32>
    %2 = arith.mulf %1, %1 : vector<128x128xf32>
    %cst = arith.constant 1.000000e+00 : f32
    %3 = vector.broadcast %cst : f32 to vector<128x128xf32>
    %4 = arith.subf %3, %2 : vector<128x128xf32>
    %5 = tpu.transpose %4, [1, 0] : vector<128x128xf32> -> vector<128x128xf32>
    %c0_1 = arith.constant 0 : index
    %c0_2 = arith.constant 0 : index
    %6 = vector.load %arg3[%c0_1, %c0_2] : memref<128x128xf32, #tpu.memory_space<vmem>>, vector<128x128xf32>
    tpu.vector_store %arg3[%c0_1, %c0_2], %5 {strides = array<i32>} : memref<128x128xf32, #tpu.memory_space<vmem>>, vector<128x128xf32>,
    return
  }
  func.func @transform_0(%arg0: i32, %arg1: i32) -> (i32, i32) {
    %c0_i32 = arith.constant 0 : i32
    return %arg0, %arg1 : i32, i32
  }
  func.func @transform_1(%arg0: i32, %arg1: i32) -> (i32, i32) {
    %c0_i32 = arith.constant 0 : i32
    return %arg1, %arg0 : i32, i32
  }
}

</mosaic_0001>

<llo_original>
// kernel: _derivtanh_impl.1
$region0: #{_derivtanh_impl.1}
  #allocation0 [shape = 'u32[]', space=smem, size = 0x4, offset = 0x4, fixed_abs, tag = 'smem constant byte address 0x4 - core index']
  #allocation1 [shape = 'u32[72,128]{1,0:T(1,128)}', space=vmem, size = 0x9000, scoped, tag = 'internal scratch']
  %s0 = inlined_call_operand.vmem [shape: f32[128,128], index: 0, kind: input, shape index: {}]
  %s1 = inlined_call_operand.vmem [shape: f32[128,128], index: 1, kind: output, shape index: {}]
  %s2 = sld [smem:[#allocation0]]
  $region14: #{_derivtanh_impl.1} parent=0
    _
  %s4 = ssub.s32 1, %s2
  %s5 = scalar_select 0, %s4, %s2
  // Predicated region
  $region2: #{_derivtanh_impl.1} parent=0 // pred_check
    _
  $region3: #{_derivtanh_impl.1} parent=0 // pred_check_branch
    %7 = sbr.rel (0) target = $region5
  $region4: #{_derivtanh_impl.1} parent=0 // pred_region
    _
  $region5: #{_derivtanh_impl.1} parent=0 // pred_fallthru
    _
  %v8 = vld [vmem:[%s0] sm:$0xff]
  %v9 = vld [vmem:[%s0 + $0x8] sm:$0xff]
  %v10 = vld [vmem:[%s0 + $0x10] sm:$0xff]
  %v11 = vld [vmem:[%s0 + $0x18] sm:$0xff]
  %v12 = vld [vmem:[%s0 + $0x20] sm:$0xff]
  %v13 = vld [vmem:[%s0 + $0x28] sm:$0xff]
  %v14 = vld [vmem:[%s0 + $0x30] sm:$0xff]
  %v15 = vld [vmem:[%s0 + $0x38] sm:$0xff]
  %v16 = vld [vmem:[%s0 + $0x40] sm:$0xff]
  %v17 = vld [vmem:[%s0 + $0x48] sm:$0xff]
  %v18 = vld [vmem:[%s0 + $0x50] sm:$0xff]
  %v19 = vld [vmem:[%s0 + $0x58] sm:$0xff]
  %v20 = vld [vmem:[%s0 + $0x60] sm:$0xff]
  %v21 = vld [vmem:[%s0 + $0x68] sm:$0xff]
  %v22 = vld [vmem:[%s0 + $0x70] sm:$0xff]
  %v23 = vld [vmem:[%s0 + $0x78] sm:$0xff]
  %v24 = vtanh.pop %v8
  %v25 = vtanh.pop %v9
  %v26 = vtanh.pop %v10
  %v27 = vtanh.pop %v11
  %v28 = vtanh.pop %v12
  %v29 = vtanh.pop %v13
  %v30 = vtanh.pop %v14
  %v31 = vtanh.pop %v15
  %v32 = vtanh.pop %v16
  %v33 = vtanh.pop %v17
  %v34 = vtanh.pop %v18
  %v35 = vtanh.pop %v19
  %v36 = vtanh.pop %v20
  %v37 = vtanh.pop %v21
  %v38 = vtanh.pop %v22
  %v39 = vtanh.pop %v23
  %v40 = vmul.f32 %v24, %v24
  %v41 = vmul.f32 %v25, %v25
  %v42 = vmul.f32 %v26, %v26
  %v43 = vmul.f32 %v27, %v27
  %v44 = vmul.f32 %v28, %v28
  %v45 = vmul.f32 %v29, %v29
  %v46 = vmul.f32 %v30, %v30
  %v47 = vmul.f32 %v31, %v31
  %v48 = vmul.f32 %v32, %v32
  %v49 = vmul.f32 %v33, %v33
  %v50 = vmul.f32 %v34, %v34
  %v51 = vmul.f32 %v35, %v35
  %v52 = vmul.f32 %v36, %v36
  %v53 = vmul.f32 %v37, %v37
  %v54 = vmul.f32 %v38, %v38
  %v55 = vmul.f32 %v39, %v39
  %v56 = vsub.f32 1.0, %v40
  %v57 = vsub.f32 1.0, %v41
  %v58 = vsub.f32 1.0, %v42
  %v59 = vsub.f32 1.0, %v43
  %v60 = vsub.f32 1.0, %v44
  %v61 = vsub.f32 1.0, %v45
  %v62 = vsub.f32 1.0, %v46
  %v63 = vsub.f32 1.0, %v47
  %v64 = vsub.f32 1.0, %v48
  %v65 = vsub.f32 1.0, %v49
  %v66 = vsub.f32 1.0, %v50
  %v67 = vsub.f32 1.0, %v51
  %v68 = vsub.f32 1.0, %v52
  %v69 = vsub.f32 1.0, %v53
  %v70 = vsub.f32 1.0, %v54
  %v71 = vsub.f32 1.0, %v55
  %72 = vxpose.xlu0.b32.start [1/16] %v56, 128
  %73 = vxpose.xlu0.b32.cont [2/16] %v57, 128
  %74 = vxpose.xlu0.b32.cont [3/16] %v58, 128
  %75 = vxpose.xlu0.b32.cont [4/16] %v59, 128
  %76 = vxpose.xlu0.b32.cont [5/16] %v60, 128
  %77 = vxpose.xlu0.b32.cont [6/16] %v61, 128
  %78 = vxpose.xlu0.b32.cont [7/16] %v62, 128
  %79 = vxpose.xlu0.b32.cont [8/16] %v63, 128
  %80 = vxpose.xlu0.b32.cont [9/16] %v64, 128
  %81 = vxpose.xlu0.b32.cont [10/16] %v65, 128
  %82 = vxpose.xlu0.b32.cont [11/16] %v66, 128
  %83 = vxpose.xlu0.b32.cont [12/16] %v67, 128
  %84 = vxpose.xlu0.b32.cont [13/16] %v68, 128
  %85 = vxpose.xlu0.b32.cont [14/16] %v69, 128
  %86 = vxpose.xlu0.b32.cont [15/16] %v70, 128
  %87 = vxpose.xlu0.b32.end [16/16] %v71, 128
  %v88 = vpop.trf.xlu0
  %v89 = vpop.trf.xlu0
  %v90 = vpop.trf.xlu0
  %v91 = vpop.trf.xlu0
  %v92 = vpop.trf.xlu0
  %v93 = vpop.trf.xlu0
  %v94 = vpop.trf.xlu0
  %v95 = vpop.trf.xlu0
  %v96 = vpop.trf.xlu0
  %v97 = vpop.trf.xlu0
  %v98 = vpop.trf.xlu0
  %v99 = vpop.trf.xlu0
  %v100 = vpop.trf.xlu0
  %v101 = vpop.trf.xlu0
  %v102 = vpop.trf.xlu0
  %v103 = vpop.trf.xlu0
  %104 = vst [vmem:[%s1] sm:$0xff] %v88
  %105 = vst [vmem:[%s1 + $0x8] sm:$0xff] %v89
  %106 = vst [vmem:[%s1 + $0x10] sm:$0xff] %v90
  %107 = vst [vmem:[%s1 + $0x18] sm:$0xff] %v91
  %108 = vst [vmem:[%s1 + $0x20] sm:$0xff] %v92
  %109 = vst [vmem:[%s1 + $0x28] sm:$0xff] %v93
  %110 = vst [vmem:[%s1 + $0x30] sm:$0xff] %v94
  %111 = vst [vmem:[%s1 + $0x38] sm:$0xff] %v95
  %112 = vst [vmem:[%s1 + $0x40] sm:$0xff] %v96
  %113 = vst [vmem:[%s1 + $0x48] sm:$0xff] %v97
  %114 = vst [vmem:[%s1 + $0x50] sm:$0xff] %v98
  %115 = vst [vmem:[%s1 + $0x58] sm:$0xff] %v99
  %116 = vst [vmem:[%s1 + $0x60] sm:$0xff] %v100
  %117 = vst [vmem:[%s1 + $0x68] sm:$0xff] %v101
  %118 = vst [vmem:[%s1 + $0x70] sm:$0xff] %v102
  %119 = vst [vmem:[%s1 + $0x78] sm:$0xff] %v103
  // Predicated region
  $region6: #{_derivtanh_impl.1} parent=0 // pred_check
    _
  $region7: #{_derivtanh_impl.1} parent=0 // pred_check_branch
    %121 = sbr.rel (0) target = $region9
  $region8: #{_derivtanh_impl.1} parent=0 // pred_region
    _
  $region9: #{_derivtanh_impl.1} parent=0 // pred_fallthru
    _
  // Predicated region
  $region10: #{_derivtanh_impl.1} parent=0 // pred_check
    _
  $region11: #{_derivtanh_impl.1} parent=0 // pred_check_branch
    %123 = sbr.rel (0) target = $region13
  $region12: #{_derivtanh_impl.1} parent=0 // pred_region
    _
  $region13: #{_derivtanh_impl.1} parent=0 // pred_fallthru
    _

</llo_original>
